<compile_context>
chip_gen: v7x
topology: tpu7x:2x2x1
jax: 0.10.0
libtpu: 0.0.40
codegen_flags: <defaults>
</compile_context>

<pallas_src>
import functools

import numpy as np
import jax
import jax.numpy as jnp
from jax import lax
from jax.experimental import pallas as pl
from jax.experimental.pallas import tpu as pltpu

K = 5          # SRM filter spatial size
OUTC = 3       # SRM always produces 3 output channels
PAD = 2        # padding=2 for the 5x5 kernel


def _srm_filters() -> np.ndarray:
    """The three fixed SRM 5x5 filters, shape (3, 5, 5), float32."""
    f1 = np.asarray(
        [[0, 0, 0, 0, 0],
         [0, -1, 2, -1, 0],
         [0, 2, -4, 2, 0],
         [0, -1, 2, -1, 0],
         [0, 0, 0, 0, 0]], dtype=np.float64) / 4.0
    f2 = np.asarray(
        [[-1, 2, -2, 2, -1],
         [2, -6, 8, -6, 2],
         [-2, 8, -12, 8, -2],
         [2, -6, 8, -6, 2],
         [-1, 2, -2, 2, -1]], dtype=np.float64) / 12.0
    f3 = np.asarray(
        [[0, 0, 0, 0, 0],
         [0, 0, 0, 0, 0],
         [0, 1, -2, 1, 0],
         [0, 0, 0, 0, 0],
         [0, 0, 0, 0, 0]], dtype=np.float64) / 2.0
    return np.stack([f1, f2, f3], axis=0).astype(np.float32)


_FILTERS = _srm_filters()

# Nonzero taps per output channel, baked as compile-time constants:
# filter1 -> 9 taps, filter2 -> 25 taps, filter3 -> 3 taps (37 total).
_TAPS = tuple(
    tuple((dh, dw, float(_FILTERS[oc, dh, dw]))
          for dh in range(K) for dw in range(K)
          if float(_FILTERS[oc, dh, dw]) != 0.0)
    for oc in range(OUTC))


def build_srm_weights(inc: int = 3) -> jnp.ndarray:
    """Full (3, inc, 5, 5) SRM bank (replicated across input channels).

    Only used by the pure-JAX reference; the kernel uses the baked constants.
    """
    w = np.repeat(_FILTERS[:, None, :, :], inc, axis=1)
    return jnp.asarray(w, dtype=jnp.float32)


# ---------------------------------------------------------------------------
# Kernel
# ---------------------------------------------------------------------------
def _srm_kernel(xs_hbm, o_ref, xbuf, sem, *, W, TH, RB):
    """One (batch, H-tile) grid step.

    xs_hbm : (N, H+4, W+4) zero-padded, channel-summed input (HBM, pl.ANY).
    o_ref  : (1, 3, TH, W) output block (VMEM, auto-pipelined by BlockSpec).
    xbuf   : (2, RB+4, W+4) VMEM scratch -- manual double buffer of row bands.
    sem    : (2,) DMA semaphores.
    """
    b = pl.program_id(0)
    t = pl.program_id(1)
    RBH = RB + 4            # band rows + 4-row conv halo
    NS = TH // RB           # number of row bands in this tile (static)
    aligned = (TH % 8 == 0) and (RB % 8 == 0)

    def band_copy(j, slot):
        # First padded input row needed for output rows [t*TH + j*RB, ... + RB).
        row0 = t * TH + j * RB
        if aligned:
            row0 = pl.multiple_of(row0, 8)
        return pltpu.make_async_copy(
            xs_hbm.at[b, pl.ds(row0, RBH), :],
            xbuf.at[slot],
            sem.at[slot])

    # Prime with band 0, then overlap the DMA of band j+1 with compute of band
    # j.  All DMAs start and finish inside this grid step, so both grid axes
    # are safely "parallel" (megacore sharding).
    band_copy(0, 0).start()

    for j in range(NS):                      # static Python loop, fully unrolled
        slot = j & 1
        if j + 1 < NS:
            band_copy(j + 1, 1 - slot).start()
        band_copy(j, slot).wait()

        xsum = xbuf[slot]                    # (RBH, W+4) f32, channel-summed

        # 37 nonzero taps across the three fixed 5x5 filters; coefficients are
        # compile-time constants and slices are static, so this lowers to
        # lane/sublane shifts + VPU multiply-adds (no weight broadcasts).
        for oc in range(OUTC):
            acc = None
            for (dh, dw, coef) in _TAPS[oc]:
                term = coef * xsum[dh:dh + RB, dw:dw + W]
                acc = term if acc is None else acc + term
            # Hardtanh(-3, 3)
            o_ref[0, oc, j * RB:(j + 1) * RB, :] = jnp.clip(acc, -3.0, 3.0)


# ---------------------------------------------------------------------------
# Wrapper
# ---------------------------------------------------------------------------
def _pick_h_tile(H, W):
    """Largest H-tile that divides H, is sublane-aligned, and keeps one
    (double-buffered) output block small on every TPU generation."""
    block_budget = 4 * 1024 * 1024            # bytes for ONE output block
    for cand in (1024, 512, 256, 128, 64, 32, 16, 8):
        if cand <= H and H % cand == 0 and OUTC * cand * W * 4 <= block_budget:
            return cand
    return H                                   # tiny / odd images: single tile


def _pick_row_band(TH):
    for cand in (64, 32, 16, 8):
        if TH % cand == 0:
            return cand
    return TH


@jax.jit
def srm_conv2d_simple(x: jnp.ndarray) -> jnp.ndarray:
    """SRMConv2d_simple forward: fixed SRM bank, stride 1, padding 2, Hardtanh(-3,3).

    x: (N, C, H, W) -> (N, 3, H, W) float32.

    Exploits the module structure (identical 5x5 filter replicated across input
    channels, learnable=False) exactly as produced by `_build_kernel`.
    """
    N, C, H, W = x.shape
    x = x.astype(jnp.float32)

    # Replicated-filter trick: conv over C channels == conv of the channel sum.
    # Sum + 2px zero-pad fuse into one cheap XLA pass over the input.
    xs_pad = jnp.pad(jnp.sum(x, axis=1), ((0, 0), (PAD, PAD), (PAD, PAD)))
    Wp = W + 2 * PAD

    TH = _pick_h_tile(H, W)       # output rows per grid step
    RB = _pick_row_band(TH)       # output rows per DMA'd band inside a step
    T = H // TH

    kernel = functools.partial(_srm_kernel, W=W, TH=TH, RB=RB)

    out = pl.pallas_call(
        kernel,
        out_shape=jax.ShapeDtypeStruct((N, OUTC, H, W), jnp.float32),
        grid_spec=pltpu.PrefetchScalarGridSpec(
            num_scalar_prefetch=0,
            grid=(N, T),
            in_specs=[
                # Padded channel-summed input stays in HBM; halo'd row bands
                # are fetched with manual double-buffered DMAs in the kernel.
                pl.BlockSpec(memory_space=pl.ANY),
            ],
            out_specs=pl.BlockSpec((1, OUTC, TH, W), lambda b, t: (b, 0, t, 0)),
            scratch_shapes=[
                pltpu.VMEM((2, RB + 4, Wp), jnp.float32),
                pltpu.SemaphoreType.DMA((2,)),
            ],
        ),
        compiler_params=pltpu.CompilerParams(
            # Both axes independent -> two TensorCores split batches/row-tiles.
            dimension_semantics=("parallel", "parallel"),
            # Actual usage: <= 8 MiB output double-buffer + ~1-2 MiB band
            # scratch; well under v7x's 64 MiB physical VMEM.
            vmem_limit_bytes=32 * 1024 * 1024,
        ),
    )(xs_pad)
    return out


# ---------------------------------------------------------------------------
# Pure-JAX reference + self-test
# ---------------------------------------------------------------------------
def _reference(x):
    w = build_srm_weights(inc=x.shape[1])
    out = lax.conv_general_dilated(
        x.astype(jnp.float32), w,
        window_strides=(1, 1),
        padding=((PAD, PAD), (PAD, PAD)),
        dimension_numbers=("NCHW", "OIHW", "NCHW"),
        precision=lax.Precision.HIGHEST,
    )
    return jnp.clip(out, -3.0, 3.0)


if __name__ == "__main__":
    B, C, H, W = 2, 3, 16, 16
    key = jax.random.PRNGKey(0)
    x = jax.random.normal(key, (B, C, H, W), dtype=jnp.float32) * 2.0

    out = jax.block_until_ready(srm_conv2d_simple(x))
    ref = jax.block_until_ready(_reference(x))
    # Tolerance covers the (mathematically exact) reassociation: channel sum
    # first, then the 37 taps, vs the reference's fused C*25-tap accumulation.
    np.testing.assert_allclose(np.asarray(out), np.asarray(ref),
                               rtol=1e-5, atol=5e-4)

    print("KERNEL_OK")
</pallas_src>

<mosaic_0001>
module attributes {stable_mosaic.version = 11 : i64} {
  func.func @_srm_kernel(%arg0: i32, %arg1: i32, %arg2: memref<2x20x20xf32, #tpu.memory_space<any>>, %arg3: memref<1x3x16x16xf32, #tpu.memory_space<vmem>>, %arg4: memref<2x20x20xf32, #tpu.memory_space<vmem>>, %arg5: memref<2x!tpu.dma_semaphore, #tpu.memory_space<semaphore_mem>>) attributes {dimension_semantics = [#tpu.dimension_semantics<parallel>, #tpu.dimension_semantics<parallel>], iteration_bounds = array<i64: 2, 1>, scalar_prefetch = 0 : i64, scratch_operands = 2 : i64, tpu.core_type = #tpu.core_type<tc>, window_params = [{}, {transform_indices = @transform_1, window_bounds = array<i64: 1, 3, 16, 16>}]} {
    %c16_i32 = arith.constant 16 : i32
    %0 = arith.muli %arg1, %c16_i32 : i32
    %c0_i32 = arith.constant 0 : i32
    %1 = arith.addi %0, %c0_i32 : i32
    %2 = tpu.assume_multiple %1, 8 : i32
    %c0_i32_0 = arith.constant 0 : i32
    %c0_i32_1 = arith.constant 0 : i32
    %c0_i32_2 = arith.constant 0 : i32
    %3 = tpu.memref_slice %arg2[%arg0, %2, %c0_i32_2] : memref<2x20x20xf32, #tpu.memory_space<any>> -> memref<1x20x20xf32, #tpu.memory_space<any>>
    %4 = tpu.memref_squeeze %3 : memref<1x20x20xf32, #tpu.memory_space<any>> -> memref<20x20xf32, #tpu.memory_space<any>>
    %c0_i32_3 = arith.constant 0 : i32
    %c0_i32_4 = arith.constant 0 : i32
    %5 = tpu.memref_slice %arg4[%c0_i32_0, %c0_i32_3, %c0_i32_4] : memref<2x20x20xf32, #tpu.memory_space<vmem>> -> memref<1x20x20xf32, #tpu.memory_space<vmem>>
    %6 = tpu.memref_squeeze %5 : memref<1x20x20xf32, #tpu.memory_space<vmem>> -> memref<20x20xf32, #tpu.memory_space<vmem>>
    %7 = tpu.memref_slice %arg5[%c0_i32_1] : memref<2x!tpu.dma_semaphore, #tpu.memory_space<semaphore_mem>> -> memref<1x!tpu.dma_semaphore, #tpu.memory_space<semaphore_mem>>
    %8 = tpu.memref_squeeze %7 : memref<1x!tpu.dma_semaphore, #tpu.memory_space<semaphore_mem>> -> memref<!tpu.dma_semaphore, #tpu.memory_space<semaphore_mem>>
    tpu.enqueue_dma source(%4 : memref<20x20xf32, #tpu.memory_space<any>>) target(%6 : memref<20x20xf32, #tpu.memory_space<vmem>>) target_semaphore(%8 : memref<!tpu.dma_semaphore, #tpu.memory_space<semaphore_mem>>)
    %c16_i32_5 = arith.constant 16 : i32
    %9 = arith.muli %arg1, %c16_i32_5 : i32
    %c0_i32_6 = arith.constant 0 : i32
    %10 = arith.addi %9, %c0_i32_6 : i32
    %11 = tpu.assume_multiple %10, 8 : i32
    %c0_i32_7 = arith.constant 0 : i32
    %c0_i32_8 = arith.constant 0 : i32
    %c0_i32_9 = arith.constant 0 : i32
    %12 = tpu.memref_slice %arg2[%arg0, %11, %c0_i32_9] : memref<2x20x20xf32, #tpu.memory_space<any>> -> memref<1x20x20xf32, #tpu.memory_space<any>>
    %13 = tpu.memref_squeeze %12 : memref<1x20x20xf32, #tpu.memory_space<any>> -> memref<20x20xf32, #tpu.memory_space<any>>
    %c0_i32_10 = arith.constant 0 : i32
    %c0_i32_11 = arith.constant 0 : i32
    %14 = tpu.memref_slice %arg4[%c0_i32_7, %c0_i32_10, %c0_i32_11] : memref<2x20x20xf32, #tpu.memory_space<vmem>> -> memref<1x20x20xf32, #tpu.memory_space<vmem>>
    %15 = tpu.memref_squeeze %14 : memref<1x20x20xf32, #tpu.memory_space<vmem>> -> memref<20x20xf32, #tpu.memory_space<vmem>>
    %16 = tpu.memref_slice %arg5[%c0_i32_8] : memref<2x!tpu.dma_semaphore, #tpu.memory_space<semaphore_mem>> -> memref<1x!tpu.dma_semaphore, #tpu.memory_space<semaphore_mem>>
    %17 = tpu.memref_squeeze %16 : memref<1x!tpu.dma_semaphore, #tpu.memory_space<semaphore_mem>> -> memref<!tpu.dma_semaphore, #tpu.memory_space<semaphore_mem>>
    tpu.wait_dma2 semaphore(%17 : memref<!tpu.dma_semaphore, #tpu.memory_space<semaphore_mem>>) src(%13 : memref<20x20xf32, #tpu.memory_space<any>>) dst(%15 : memref<20x20xf32, #tpu.memory_space<vmem>>)
    %c0 = arith.constant 0 : index
    %c0_12 = arith.constant 0 : index
    %c0_13 = arith.constant 0 : index
    %18 = vector.load %arg4[%c0, %c0_12, %c0_13] : memref<2x20x20xf32, #tpu.memory_space<vmem>>, vector<1x20x20xf32>
    %19 = vector.shape_cast %18 : vector<1x20x20xf32> to vector<20x20xf32>
    %20 = vector.extract_strided_slice %19 {offsets = [1, 1], sizes = [16, 16], strides = [1, 1]} : vector<20x20xf32> to vector<16x16xf32>
    %cst = arith.constant -2.500000e-01 : f32
    %21 = vector.broadcast %cst : f32 to vector<16x16xf32>
    %22 = arith.mulf %21, %20 : vector<16x16xf32>
    %23 = vector.extract_strided_slice %19 {offsets = [1, 2], sizes = [16, 16], strides = [1, 1]} : vector<20x20xf32> to vector<16x16xf32>
    %cst_14 = arith.constant 5.000000e-01 : f32
    %24 = vector.broadcast %cst_14 : f32 to vector<16x16xf32>
    %25 = arith.mulf %24, %23 : vector<16x16xf32>
    %26 = arith.addf %22, %25 : vector<16x16xf32>
    %27 = vector.extract_strided_slice %19 {offsets = [1, 3], sizes = [16, 16], strides = [1, 1]} : vector<20x20xf32> to vector<16x16xf32>
    %cst_15 = arith.constant -2.500000e-01 : f32
    %28 = vector.broadcast %cst_15 : f32 to vector<16x16xf32>
    %29 = arith.mulf %28, %27 : vector<16x16xf32>
    %30 = arith.addf %26, %29 : vector<16x16xf32>
    %31 = vector.extract_strided_slice %19 {offsets = [2, 1], sizes = [16, 16], strides = [1, 1]} : vector<20x20xf32> to vector<16x16xf32>
    %cst_16 = arith.constant 5.000000e-01 : f32
    %32 = vector.broadcast %cst_16 : f32 to vector<16x16xf32>
    %33 = arith.mulf %32, %31 : vector<16x16xf32>
    %34 = arith.addf %30, %33 : vector<16x16xf32>
    %35 = vector.extract_strided_slice %19 {offsets = [2, 2], sizes = [16, 16], strides = [1, 1]} : vector<20x20xf32> to vector<16x16xf32>
    %cst_17 = arith.constant -1.000000e+00 : f32
    %36 = vector.broadcast %cst_17 : f32 to vector<16x16xf32>
    %37 = arith.mulf %36, %35 : vector<16x16xf32>
    %38 = arith.addf %34, %37 : vector<16x16xf32>
    %39 = vector.extract_strided_slice %19 {offsets = [2, 3], sizes = [16, 16], strides = [1, 1]} : vector<20x20xf32> to vector<16x16xf32>
    %cst_18 = arith.constant 5.000000e-01 : f32
    %40 = vector.broadcast %cst_18 : f32 to vector<16x16xf32>
    %41 = arith.mulf %40, %39 : vector<16x16xf32>
    %42 = arith.addf %38, %41 : vector<16x16xf32>
    %43 = vector.extract_strided_slice %19 {offsets = [3, 1], sizes = [16, 16], strides = [1, 1]} : vector<20x20xf32> to vector<16x16xf32>
    %cst_19 = arith.constant -2.500000e-01 : f32
    %44 = vector.broadcast %cst_19 : f32 to vector<16x16xf32>
    %45 = arith.mulf %44, %43 : vector<16x16xf32>
    %46 = arith.addf %42, %45 : vector<16x16xf32>
    %47 = vector.extract_strided_slice %19 {offsets = [3, 2], sizes = [16, 16], strides = [1, 1]} : vector<20x20xf32> to vector<16x16xf32>
    %cst_20 = arith.constant 5.000000e-01 : f32
    %48 = vector.broadcast %cst_20 : f32 to vector<16x16xf32>
    %49 = arith.mulf %48, %47 : vector<16x16xf32>
    %50 = arith.addf %46, %49 : vector<16x16xf32>
    %51 = vector.extract_strided_slice %19 {offsets = [3, 3], sizes = [16, 16], strides = [1, 1]} : vector<20x20xf32> to vector<16x16xf32>
    %cst_21 = arith.constant -2.500000e-01 : f32
    %52 = vector.broadcast %cst_21 : f32 to vector<16x16xf32>
    %53 = arith.mulf %52, %51 : vector<16x16xf32>
    %54 = arith.addf %50, %53 : vector<16x16xf32>
    %cst_22 = arith.constant -3.000000e+00 : f32
    %cst_23 = arith.constant 3.000000e+00 : f32
    %55 = vector.broadcast %cst_22 : f32 to vector<16x16xf32>
    %56 = arith.maximumf %55, %54 : vector<16x16xf32>
    %57 = vector.broadcast %cst_23 : f32 to vector<16x16xf32>
    %58 = arith.minimumf %57, %56 : vector<16x16xf32>
    %c0_24 = arith.constant 0 : index
    %c0_25 = arith.constant 0 : index
    %c0_26 = arith.constant 0 : index
    %c0_27 = arith.constant 0 : index
    %59 = vector.load %arg3[%c0_24, %c0_25, %c0_26, %c0_27] : memref<1x3x16x16xf32, #tpu.memory_space<vmem>>, vector<1x1x16x16xf32>
    %60 = vector.shape_cast %59 : vector<1x1x16x16xf32> to vector<16x16xf32>
    %61 = vector.shape_cast %58 : vector<16x16xf32> to vector<1x1x16x16xf32>
    tpu.vector_store %arg3[%c0_24, %c0_25, %c0_26, %c0_27], %61 {strides = array<i32>} : memref<1x3x16x16xf32, #tpu.memory_space<vmem>>, vector<1x1x16x16xf32>,
    %62 = vector.extract_strided_slice %19 {offsets = [0, 0], sizes = [16, 16], strides = [1, 1]} : vector<20x20xf32> to vector<16x16xf32>
    %cst_28 = arith.constant -0.0833333358 : f32
    %63 = vector.broadcast %cst_28 : f32 to vector<16x16xf32>
    %64 = arith.mulf %63, %62 : vector<16x16xf32>
    %65 = vector.extract_strided_slice %19 {offsets = [0, 1], sizes = [16, 16], strides = [1, 1]} : vector<20x20xf32> to vector<16x16xf32>
    %cst_29 = arith.constant 0.166666672 : f32
    %66 = vector.broadcast %cst_29 : f32 to vector<16x16xf32>
    %67 = arith.mulf %66, %65 : vector<16x16xf32>
    %68 = arith.addf %64, %67 : vector<16x16xf32>
    %69 = vector.extract_strided_slice %19 {offsets = [0, 2], sizes = [16, 16], strides = [1, 1]} : vector<20x20xf32> to vector<16x16xf32>
    %cst_30 = arith.constant -0.166666672 : f32
    %70 = vector.broadcast %cst_30 : f32 to vector<16x16xf32>
    %71 = arith.mulf %70, %69 : vector<16x16xf32>
    %72 = arith.addf %68, %71 : vector<16x16xf32>
    %73 = vector.extract_strided_slice %19 {offsets = [0, 3], sizes = [16, 16], strides = [1, 1]} : vector<20x20xf32> to vector<16x16xf32>
    %cst_31 = arith.constant 0.166666672 : f32
    %74 = vector.broadcast %cst_31 : f32 to vector<16x16xf32>
    %75 = arith.mulf %74, %73 : vector<16x16xf32>
    %76 = arith.addf %72, %75 : vector<16x16xf32>
    %77 = vector.extract_strided_slice %19 {offsets = [0, 4], sizes = [16, 16], strides = [1, 1]} : vector<20x20xf32> to vector<16x16xf32>
    %cst_32 = arith.constant -0.0833333358 : f32
    %78 = vector.broadcast %cst_32 : f32 to vector<16x16xf32>
    %79 = arith.mulf %78, %77 : vector<16x16xf32>
    %80 = arith.addf %76, %79 : vector<16x16xf32>
    %81 = vector.extract_strided_slice %19 {offsets = [1, 0], sizes = [16, 16], strides = [1, 1]} : vector<20x20xf32> to vector<16x16xf32>
    %cst_33 = arith.constant 0.166666672 : f32
    %82 = vector.broadcast %cst_33 : f32 to vector<16x16xf32>
    %83 = arith.mulf %82, %81 : vector<16x16xf32>
    %84 = arith.addf %80, %83 : vector<16x16xf32>
    %85 = vector.extract_strided_slice %19 {offsets = [1, 1], sizes = [16, 16], strides = [1, 1]} : vector<20x20xf32> to vector<16x16xf32>
    %cst_34 = arith.constant -5.000000e-01 : f32
    %86 = vector.broadcast %cst_34 : f32 to vector<16x16xf32>
    %87 = arith.mulf %86, %85 : vector<16x16xf32>
    %88 = arith.addf %84, %87 : vector<16x16xf32>
    %89 = vector.extract_strided_slice %19 {offsets = [1, 2], sizes = [16, 16], strides = [1, 1]} : vector<20x20xf32> to vector<16x16xf32>
    %cst_35 = arith.constant 0.666666686 : f32
    %90 = vector.broadcast %cst_35 : f32 to vector<16x16xf32>
    %91 = arith.mulf %90, %89 : vector<16x16xf32>
    %92 = arith.addf %88, %91 : vector<16x16xf32>
    %93 = vector.extract_strided_slice %19 {offsets = [1, 3], sizes = [16, 16], strides = [1, 1]} : vector<20x20xf32> to vector<16x16xf32>
    %cst_36 = arith.constant -5.000000e-01 : f32
    %94 = vector.broadcast %cst_36 : f32 to vector<16x16xf32>
    %95 = arith.mulf %94, %93 : vector<16x16xf32>
    %96 = arith.addf %92, %95 : vector<16x16xf32>
    %97 = vector.extract_strided_slice %19 {offsets = [1, 4], sizes = [16, 16], strides = [1, 1]} : vector<20x20xf32> to vector<16x16xf32>
    %cst_37 = arith.constant 0.166666672 : f32
    %98 = vector.broadcast %cst_37 : f32 to vector<16x16xf32>
    %99 = arith.mulf %98, %97 : vector<16x16xf32>
    %100 = arith.addf %96, %99 : vector<16x16xf32>
    %101 = vector.extract_strided_slice %19 {offsets = [2, 0], sizes = [16, 16], strides = [1, 1]} : vector<20x20xf32> to vector<16x16xf32>
    %cst_38 = arith.constant -0.166666672 : f32
    %102 = vector.broadcast %cst_38 : f32 to vector<16x16xf32>
    %103 = arith.mulf %102, %101 : vector<16x16xf32>
    %104 = arith.addf %100, %103 : vector<16x16xf32>
    %105 = vector.extract_strided_slice %19 {offsets = [2, 1], sizes = [16, 16], strides = [1, 1]} : vector<20x20xf32> to vector<16x16xf32>
    %cst_39 = arith.constant 0.666666686 : f32
    %106 = vector.broadcast %cst_39 : f32 to vector<16x16xf32>
    %107 = arith.mulf %106, %105 : vector<16x16xf32>
    %108 = arith.addf %104, %107 : vector<16x16xf32>
    %109 = vector.extract_strided_slice %19 {offsets = [2, 2], sizes = [16, 16], strides = [1, 1]} : vector<20x20xf32> to vector<16x16xf32>
    %cst_40 = arith.constant -1.000000e+00 : f32
    %110 = vector.broadcast %cst_40 : f32 to vector<16x16xf32>
    %111 = arith.mulf %110, %109 : vector<16x16xf32>
    %112 = arith.addf %108, %111 : vector<16x16xf32>
    %113 = vector.extract_strided_slice %19 {offsets = [2, 3], sizes = [16, 16], strides = [1, 1]} : vector<20x20xf32> to vector<16x16xf32>
    %cst_41 = arith.constant 0.666666686 : f32
    %114 = vector.broadcast %cst_41 : f32 to vector<16x16xf32>
    %115 = arith.mulf %114, %113 : vector<16x16xf32>
    %116 = arith.addf %112, %115 : vector<16x16xf32>
    %117 = vector.extract_strided_slice %19 {offsets = [2, 4], sizes = [16, 16], strides = [1, 1]} : vector<20x20xf32> to vector<16x16xf32>
    %cst_42 = arith.constant -0.166666672 : f32
    %118 = vector.broadcast %cst_42 : f32 to vector<16x16xf32>
    %119 = arith.mulf %118, %117 : vector<16x16xf32>
    %120 = arith.addf %116, %119 : vector<16x16xf32>
    %121 = vector.extract_strided_slice %19 {offsets = [3, 0], sizes = [16, 16], strides = [1, 1]} : vector<20x20xf32> to vector<16x16xf32>
    %cst_43 = arith.constant 0.166666672 : f32
    %122 = vector.broadcast %cst_43 : f32 to vector<16x16xf32>
    %123 = arith.mulf %122, %121 : vector<16x16xf32>
    %124 = arith.addf %120, %123 : vector<16x16xf32>
    %125 = vector.extract_strided_slice %19 {offsets = [3, 1], sizes = [16, 16], strides = [1, 1]} : vector<20x20xf32> to vector<16x16xf32>
    %cst_44 = arith.constant -5.000000e-01 : f32
    %126 = vector.broadcast %cst_44 : f32 to vector<16x16xf32>
    %127 = arith.mulf %126, %125 : vector<16x16xf32>
    %128 = arith.addf %124, %127 : vector<16x16xf32>
    %129 = vector.extract_strided_slice %19 {offsets = [3, 2], sizes = [16, 16], strides = [1, 1]} : vector<20x20xf32> to vector<16x16xf32>
    %cst_45 = arith.constant 0.666666686 : f32
    %130 = vector.broadcast %cst_45 : f32 to vector<16x16xf32>
    %131 = arith.mulf %130, %129 : vector<16x16xf32>
    %132 = arith.addf %128, %131 : vector<16x16xf32>
    %133 = vector.extract_strided_slice %19 {offsets = [3, 3], sizes = [16, 16], strides = [1, 1]} : vector<20x20xf32> to vector<16x16xf32>
    %cst_46 = arith.constant -5.000000e-01 : f32
    %134 = vector.broadcast %cst_46 : f32 to vector<16x16xf32>
    %135 = arith.mulf %134, %133 : vector<16x16xf32>
    %136 = arith.addf %132, %135 : vector<16x16xf32>
    %137 = vector.extract_strided_slice %19 {offsets = [3, 4], sizes = [16, 16], strides = [1, 1]} : vector<20x20xf32> to vector<16x16xf32>
    %cst_47 = arith.constant 0.166666672 : f32
    %138 = vector.broadcast %cst_47 : f32 to vector<16x16xf32>
    %139 = arith.mulf %138, %137 : vector<16x16xf32>
    %140 = arith.addf %136, %139 : vector<16x16xf32>
    %141 = vector.extract_strided_slice %19 {offsets = [4, 0], sizes = [16, 16], strides = [1, 1]} : vector<20x20xf32> to vector<16x16xf32>
    %cst_48 = arith.constant -0.0833333358 : f32
    %142 = vector.broadcast %cst_48 : f32 to vector<16x16xf32>
    %143 = arith.mulf %142, %141 : vector<16x16xf32>
    %144 = arith.addf %140, %143 : vector<16x16xf32>
    %145 = vector.extract_strided_slice %19 {offsets = [4, 1], sizes = [16, 16], strides = [1, 1]} : vector<20x20xf32> to vector<16x16xf32>
    %cst_49 = arith.constant 0.166666672 : f32
    %146 = vector.broadcast %cst_49 : f32 to vector<16x16xf32>
    %147 = arith.mulf %146, %145 : vector<16x16xf32>
    %148 = arith.addf %144, %147 : vector<16x16xf32>
    %149 = vector.extract_strided_slice %19 {offsets = [4, 2], sizes = [16, 16], strides = [1, 1]} : vector<20x20xf32> to vector<16x16xf32>
    %cst_50 = arith.constant -0.166666672 : f32
    %150 = vector.broadcast %cst_50 : f32 to vector<16x16xf32>
    %151 = arith.mulf %150, %149 : vector<16x16xf32>
    %152 = arith.addf %148, %151 : vector<16x16xf32>
    %153 = vector.extract_strided_slice %19 {offsets = [4, 3], sizes = [16, 16], strides = [1, 1]} : vector<20x20xf32> to vector<16x16xf32>
    %cst_51 = arith.constant 0.166666672 : f32
    %154 = vector.broadcast %cst_51 : f32 to vector<16x16xf32>
    %155 = arith.mulf %154, %153 : vector<16x16xf32>
    %156 = arith.addf %152, %155 : vector<16x16xf32>
    %157 = vector.extract_strided_slice %19 {offsets = [4, 4], sizes = [16, 16], strides = [1, 1]} : vector<20x20xf32> to vector<16x16xf32>
    %cst_52 = arith.constant -0.0833333358 : f32
    %158 = vector.broadcast %cst_52 : f32 to vector<16x16xf32>
    %159 = arith.mulf %158, %157 : vector<16x16xf32>
    %160 = arith.addf %156, %159 : vector<16x16xf32>
    %cst_53 = arith.constant -3.000000e+00 : f32
    %cst_54 = arith.constant 3.000000e+00 : f32
    %161 = vector.broadcast %cst_53 : f32 to vector<16x16xf32>
    %162 = arith.maximumf %161, %160 : vector<16x16xf32>
    %163 = vector.broadcast %cst_54 : f32 to vector<16x16xf32>
    %164 = arith.minimumf %163, %162 : vector<16x16xf32>
    %c0_55 = arith.constant 0 : index
    %c1 = arith.constant 1 : index
    %c0_56 = arith.constant 0 : index
    %c0_57 = arith.constant 0 : index
    %165 = vector.load %arg3[%c0_55, %c1, %c0_56, %c0_57] : memref<1x3x16x16xf32, #tpu.memory_space<vmem>>, vector<1x1x16x16xf32>
    %166 = vector.shape_cast %165 : vector<1x1x16x16xf32> to vector<16x16xf32>
    %167 = vector.shape_cast %164 : vector<16x16xf32> to vector<1x1x16x16xf32>
    tpu.vector_store %arg3[%c0_55, %c1, %c0_56, %c0_57], %167 {strides = array<i32>} : memref<1x3x16x16xf32, #tpu.memory_space<vmem>>, vector<1x1x16x16xf32>,
    %168 = vector.extract_strided_slice %19 {offsets = [2, 1], sizes = [16, 16], strides = [1, 1]} : vector<20x20xf32> to vector<16x16xf32>
    %cst_58 = arith.constant 5.000000e-01 : f32
    %169 = vector.broadcast %cst_58 : f32 to vector<16x16xf32>
    %170 = arith.mulf %169, %168 : vector<16x16xf32>
    %171 = vector.extract_strided_slice %19 {offsets = [2, 2], sizes = [16, 16], strides = [1, 1]} : vector<20x20xf32> to vector<16x16xf32>
    %cst_59 = arith.constant -1.000000e+00 : f32
    %172 = vector.broadcast %cst_59 : f32 to vector<16x16xf32>
    %173 = arith.mulf %172, %171 : vector<16x16xf32>
    %174 = arith.addf %170, %173 : vector<16x16xf32>
    %175 = vector.extract_strided_slice %19 {offsets = [2, 3], sizes = [16, 16], strides = [1, 1]} : vector<20x20xf32> to vector<16x16xf32>
    %cst_60 = arith.constant 5.000000e-01 : f32
    %176 = vector.broadcast %cst_60 : f32 to vector<16x16xf32>
    %177 = arith.mulf %176, %175 : vector<16x16xf32>
    %178 = arith.addf %174, %177 : vector<16x16xf32>
    %cst_61 = arith.constant -3.000000e+00 : f32
    %cst_62 = arith.constant 3.000000e+00 : f32
    %179 = vector.broadcast %cst_61 : f32 to vector<16x16xf32>
    %180 = arith.maximumf %179, %178 : vector<16x16xf32>
    %181 = vector.broadcast %cst_62 : f32 to vector<16x16xf32>
    %182 = arith.minimumf %181, %180 : vector<16x16xf32>
    %c0_63 = arith.constant 0 : index
    %c2 = arith.constant 2 : index
    %c0_64 = arith.constant 0 : index
    %c0_65 = arith.constant 0 : index
    %183 = vector.load %arg3[%c0_63, %c2, %c0_64, %c0_65] : memref<1x3x16x16xf32, #tpu.memory_space<vmem>>, vector<1x1x16x16xf32>
    %184 = vector.shape_cast %183 : vector<1x1x16x16xf32> to vector<16x16xf32>
    %185 = vector.shape_cast %182 : vector<16x16xf32> to vector<1x1x16x16xf32>
    tpu.vector_store %arg3[%c0_63, %c2, %c0_64, %c0_65], %185 {strides = array<i32>} : memref<1x3x16x16xf32, #tpu.memory_space<vmem>>, vector<1x1x16x16xf32>,
    return
  }
  func.func @transform_1(%arg0: i32, %arg1: i32) -> (i32, i32, i32, i32) {
    %c0_i32 = arith.constant 0 : i32
    %c0_i32_0 = arith.constant 0 : i32
    %c0_i32_1 = arith.constant 0 : i32
    return %arg0, %c0_i32, %arg1, %c0_i32_0 : i32, i32, i32, i32
  }
}

</mosaic_0001>

<llo_original>
// kernel: srm_conv2d_simple.1
$region0: #{srm_conv2d_simple.1}
  #allocation0 [shape = 'u32[]', space=smem, size = 0x4, offset = 0x4, fixed_abs, tag = 'smem constant byte address 0x4 - core index']
  #allocation1 [shape = 'u32[144,128]{1,0:T(1,128)}', space=vmem, size = 0x12000, scoped, tag = 'internal scratch']
  #allocation2 [shape = 'f32[2,20,20]{2,1,0:T(8,128)}', space=vmem, size = 0x6000, scoped, tag = 'scratch operand']
  #allocation3 [shape = 's32[2]{0}', space=sflag, size = 0x8, scoped, tag = 'scratch operand']
  #allocation6 [shape = 's32[]', space=sflag, size = 0x4, offset = 0, fixed_abs, tag = 'sflag constant byte address 0x0 - dummy sync flag']
  %s0 = inlined_call_operand.vmem [shape: f32[2,20,20], index: 0, kind: input, shape index: {}]
  %s1 = inlined_call_operand.hbm [shape: f32[2,3,16,16], index: 1, kind: output, shape index: {}]
  %s2 = sld [smem:[#allocation0]]
  $region62: #{srm_conv2d_simple.1} parent=0
    _
  %s4 = ssub.s32 1, %s2
  %s5 = scalar_select 0, %s4, %s2
  $region1: #{srm_conv2d_simple.1} parent=0
    #allocation4 [shape = 'u8[49152]{0}', space=vmem, size = 0xc000, scoped, tag = 'output window, operand 0']
    #allocation5 [shape = 's32[2]{0}', space=sflag, size = 0x8, scoped, tag = 'scoped memory for srm_conv2d_simple.1']
    %6 = vsyncpa [#allocation5], 0
    %s7 = scalar_lea.sflag [#allocation5], 1
    %8 = vsyncpa %s7, 0
    loop: start=0, step=1, limit=3
    $region2: #{srm_conv2d_simple.1} parent=1 // loop_pre_header
      _
    $region3: #{srm_conv2d_simple.1} parent=1 // loop_header
      %s10 = sphi 0, %s14
      %p11 = scmp.ge.s32.totalorder %s10, 3
      %s16 = sphi 0, %s26
      %s17 = sphi 0, %s22
      %s18 = sphi 0, %s16
      %s19 = sphi 0, %s17
      %s31 = sphi 0, %s33
      %s34 = sphi 0, %s31
      %s44 = sphi 0, %s34
    $region4: #{srm_conv2d_simple.1} parent=1 // loop_header_branch
      %13 = sbr.rel (%p11) target = $region8
    $region5: #{srm_conv2d_simple.1} parent=1 // loop_body
      %s15 = ssub.s32 %s10, 1
      %s20 = sadd.s32 1, %s17
      %p21 = scmp.ge.s32.totalorder %s20, 1
      %s22 = scalar_select %p21, 0, %s20
      %s23 = sadd.s32 1, %s16
      %s24 = scalar_select %p21, %s23, %s16
      %p25 = scmp.ge.s32.totalorder %s24, 2
      %s26 = scalar_select %p25, 0, %s24
      %s27 = ssub.s32 %s16, %s26
      %s28 = ssub.s32 %s17, %s22
      %s29 = sor.u32 %s27, %s28
      %p30 = scmp.eq.s32.totalorder %s29, 0
      %s32 = sadd.s32 %s31, 1
      %s33 = scalar_select %p30, %s31, %s32
      %p35 = pneg %p30
      %p36 = scmp.eq.s32.totalorder %s10, 1
      %p37 = por %p35, %p36
      %p38 = scmp.ne.s32.totalorder %s31, %s34
      %p39 = scmp.eq.s32.totalorder %s10, 0
      %p40 = por %p38, %p39
      %p41 = scmp.ne.s32.totalorder %s31, %s34
      %p42 = scmp.eq.s32.totalorder %s15, 1
      %p43 = por %p41, %p42
      %p45 = scmp.ne.s32.totalorder %s34, %s44
      %p46 = scmp.eq.s32.totalorder %s15, 0
      %p47 = por %p45, %p46
      %p48 = scmp.lt.s32.totalorder %s10, 2
      // Predicated region
      $region9: #{srm_conv2d_simple.1} parent=5 // pred_check
        %p49 = pneg %p48
      $region10: #{srm_conv2d_simple.1} parent=5 // pred_check_branch
        %51 = sbr.rel (%p49) target = $region12
      $region11: #{srm_conv2d_simple.1} parent=5 // pred_region
        %p52 = pneg %p40
        %p53 = pneg %p37
        %s54 = sand.u32 %s31, 1
        %s55 = scalar_lea.sflag [#allocation5], %s54
        %s56 = sand.u32 %s31, 1
        %s57 = smul.addr %s56, 48
        %s58 = scalar_lea.vmem [#allocation4], %s57
        %s59 = smul.u32 2, %s17
        %s60 = smul.u32 %s17, 16
        %s61 = smul.u32 %s16, 24
        %s62 = sadd.s32 %s60, %s61
        %s63 = scalar_lea.vmem %s0, %s62
        %p65 = scmp.lt.u32.totalorder 20, 8
        %p66 = pneg %p65
        // Predicated region
        $region13: #{srm_conv2d_simple.1} parent=11 // pred_check
          _
        $region14: #{srm_conv2d_simple.1} parent=11 // pred_check_branch
          %68 = sbr.rel (%p65) target = $region16
        $region15: #{srm_conv2d_simple.1} parent=11 // pred_region
          %s83 = sand.u32 20, 7
          %p84 = scmp.eq.s32.totalorder %s83, 0
          %p85 = pneg %p84
          // Predicated region
          $region28: #{srm_conv2d_simple.1} parent=15 // pred_check
            _
          $region29: #{srm_conv2d_simple.1} parent=15 // pred_check_branch
            %87 = sbr.rel (%p84) target = $region31
          $region30: #{srm_conv2d_simple.1} parent=15 // pred_region
            %s88 = sand.u32 20, 7
            %s89 = ssub.s32 20, %s88
            %s90 = scalar_lea.vmem %s63, %s89
            %s91 = ssub.s32 20, %s88
            %s92 = scalar_lea.vmem [#allocation2], %s91
            loop: start=0, step=1, limit=1
            $region32: #{srm_conv2d_simple.1} parent=30 // loop_pre_header
              _
            $region33: #{srm_conv2d_simple.1} parent=30 // loop_header
              %s94 = sphi 0, %s98
              %p95 = scmp.ge.s32.totalorder %s94, 1
              %s99 = sphi %s63, %s63
              %s100 = sphi [#allocation2], [#allocation2]
            $region34: #{srm_conv2d_simple.1} parent=30 // loop_header_branch
              %97 = sbr.rel (%p95) target = $region38
            $region35: #{srm_conv2d_simple.1} parent=30 // loop_body
              %v101 = vld [vmem:[%s99] sm:$0xff]
              %102 = vst [vmem:[%s100] sm:$0xff] %v101
              %v103 = vld [vmem:[%s99 + $0x8] sm:$0xff]
              %104 = vst [vmem:[%s100 + $0x8] sm:$0xff] %v103
            $region36: #{srm_conv2d_simple.1} parent=30 // loop_footer
              %s98 = sadd.s32 1, %s94
            $region37: #{srm_conv2d_simple.1} parent=30 // loop_footer_branch
              %93 = sbr.rel target = $region33
            $region38: #{srm_conv2d_simple.1} parent=30 // loop_exit
              _
            %s105 = sshllo.u32 0, %s88
            loop: start=0, step=1, limit=1
            $region39: #{srm_conv2d_simple.1} parent=30 // loop_pre_header
              _
            $region40: #{srm_conv2d_simple.1} parent=30 // loop_header
              %s107 = sphi 0, %s111
              %p108 = scmp.ge.s32.totalorder %s107, 1
              %s112 = sphi %s90, %s90
              %s113 = sphi %s92, %s92
            $region41: #{srm_conv2d_simple.1} parent=30 // loop_header_branch
              %110 = sbr.rel (%p108) target = $region45
            $region42: #{srm_conv2d_simple.1} parent=30 // loop_body
              %v114 = vld [vmem:[%s112] sm:%s105]
              %115 = vst [vmem:[%s113] sm:%s105] %v114
            $region43: #{srm_conv2d_simple.1} parent=30 // loop_footer
              %s111 = sadd.s32 1, %s107
            $region44: #{srm_conv2d_simple.1} parent=30 // loop_footer_branch
              %106 = sbr.rel target = $region40
            $region45: #{srm_conv2d_simple.1} parent=30 // loop_exit
              _
          $region31: #{srm_conv2d_simple.1} parent=15 // pred_fallthru
            _
        $region16: #{srm_conv2d_simple.1} parent=11 // pred_fallthru
          _
        // Predicated region
        $region17: #{srm_conv2d_simple.1} parent=11 // pred_check
          %p69 = pneg %p65
        $region18: #{srm_conv2d_simple.1} parent=11 // pred_check_branch
          %71 = sbr.rel (%p69) target = $region20
        $region19: #{srm_conv2d_simple.1} parent=11 // pred_region
          %s72 = sshllo.u32 0, 20
          loop: start=0, step=1, limit=1
          $region21: #{srm_conv2d_simple.1} parent=19 // loop_pre_header
            _
          $region22: #{srm_conv2d_simple.1} parent=19 // loop_header
            %s74 = sphi 0, %s78
            %p75 = scmp.ge.s32.totalorder %s74, 1
            %s79 = sphi %s63, %s63
            %s80 = sphi [#allocation2], [#allocation2]
          $region23: #{srm_conv2d_simple.1} parent=19 // loop_header_branch
            %77 = sbr.rel (%p75) target = $region27
          $region24: #{srm_conv2d_simple.1} parent=19 // loop_body
            %v81 = vld [vmem:[%s79] sm:%s72]
            %82 = vst [vmem:[%s80] sm:%s72] %v81
          $region25: #{srm_conv2d_simple.1} parent=19 // loop_footer
            %s78 = sadd.s32 1, %s74
          $region26: #{srm_conv2d_simple.1} parent=19 // loop_footer_branch
            %73 = sbr.rel target = $region22
          $region27: #{srm_conv2d_simple.1} parent=19 // loop_exit
            _
        $region20: #{srm_conv2d_simple.1} parent=11 // pred_fallthru
          _
        // Predicated region
        $region46: #{srm_conv2d_simple.1} parent=11 // pred_check
          _
        $region47: #{srm_conv2d_simple.1} parent=11 // pred_check_branch
          %118 = sbr.rel (0) target = $region49
        $region48: #{srm_conv2d_simple.1} parent=11 // pred_region
          %119 = vsyncadd [#allocation3], 320
        $region49: #{srm_conv2d_simple.1} parent=11 // pred_fallthru
          _
        %s120 = smul.u32 20, 1
        %s121 = sshll.u32 %s120, 4
        %122 = dma.done [#allocation3], %s121
        %v123 = vld [vmem:[#allocation2] sm:$0xff]
        %v124 = vld [vmem:[#allocation2 + $0x8] sm:$0xff]
        %v125 = vld [vmem:[#allocation2 + $0x10] sm:$0xf]
        %v126 = vmul.f32 %v123, -0.25
        %v127 = vmul.f32 %v124, -0.25
        %v128 = vmul.f32 %v125, -0.25
        %v129 = vmul.f32 %v123, 0.5
        %v130 = vmul.f32 %v124, 0.5
        %v131 = vmul.f32 %v125, 0.5
        %135 = vrot.lane.b32.xlu0 %v129, 127
        %v136 = vpop.permute.xlu0 %135
        %137 = vrot.lane.b32.xlu0 %v130, 127
        %v138 = vpop.permute.xlu0 %137
        %139 = vrot.lane.b32.xlu0 %v131, 127
        %v140 = vpop.permute.xlu0 %139
        %v144 = vadd.f32 %v126, %v136
        %v145 = vadd.f32 %v127, %v138
        %v146 = vadd.f32 %v128, %v140
        %150 = vrot.lane.b32.xlu0 %v126, 126
        %v151 = vpop.permute.xlu0 %150
        %152 = vrot.lane.b32.xlu0 %v127, 126
        %v153 = vpop.permute.xlu0 %152
        %154 = vrot.lane.b32.xlu0 %v128, 126
        %v155 = vpop.permute.xlu0 %154
        %v159 = vadd.f32 %v144, %v151
        %v160 = vadd.f32 %v145, %v153
        %v161 = vadd.f32 %v146, %v155
        %vm162 = vcmask 1046528
        %v163 = vrot.slane %v129, 1
        %v164 = vrot.slane %v130, 1
        %v165 = vsel %vm162, %v163, %v164
        %v166 = vrot.slane %v131, 1
        %v167 = vsel %vm162, %v164, %v166
        %v171 = vadd.f32 %v159, %v165
        %v172 = vadd.f32 %v160, %v167
        %v173 = vadd.f32 %v161, %v166
        %v174 = vmul.f32 %v123, -1.0
        %v175 = vmul.f32 %v124, -1.0
        %v176 = vmul.f32 %v125, -1.0
        %v180 = vrot.slane %v174, 1
        %v181 = vrot.slane %v175, 1
        %v182 = vsel %vm162, %v180, %v181
        %v183 = vrot.slane %v176, 1
        %v184 = vsel %vm162, %v181, %v183
        %185 = vrot.lane.b32.xlu0 %v182, 127
        %v186 = vpop.permute.xlu0 %185
        %187 = vrot.lane.b32.xlu0 %v184, 127
        %v188 = vpop.permute.xlu0 %187
        %189 = vrot.lane.b32.xlu0 %v183, 127
        %v190 = vpop.permute.xlu0 %189
        %v194 = vadd.f32 %v171, %v186
        %v195 = vadd.f32 %v172, %v188
        %v196 = vadd.f32 %v173, %v190
        %197 = vrot.lane.b32.xlu0 %v165, 126
        %v198 = vpop.permute.xlu0 %197
        %199 = vrot.lane.b32.xlu0 %v167, 126
        %v200 = vpop.permute.xlu0 %199
        %201 = vrot.lane.b32.xlu0 %v166, 126
        %v202 = vpop.permute.xlu0 %201
        %v206 = vadd.f32 %v194, %v198
        %v207 = vadd.f32 %v195, %v200
        %v208 = vadd.f32 %v196, %v202
        %vm209 = vcmask 1045504
        %v210 = vrot.slane %v126, 2
        %v211 = vrot.slane %v127, 2
        %v212 = vsel %vm209, %v210, %v211
        %v213 = vrot.slane %v128, 2
        %v214 = vsel %vm209, %v211, %v213
        %v218 = vadd.f32 %v206, %v212
        %v219 = vadd.f32 %v207, %v214
        %v220 = vadd.f32 %v208, %v213
        %v221 = vrot.slane %v129, 2
        %v222 = vrot.slane %v130, 2
        %v223 = vsel %vm209, %v221, %v222
        %v224 = vrot.slane %v131, 2
        %v225 = vsel %vm209, %v222, %v224
        %226 = vrot.lane.b32.xlu0 %v223, 127
        %v227 = vpop.permute.xlu0 %226
        %228 = vrot.lane.b32.xlu0 %v225, 127
        %v229 = vpop.permute.xlu0 %228
        %230 = vrot.lane.b32.xlu0 %v224, 127
        %v231 = vpop.permute.xlu0 %230
        %v235 = vadd.f32 %v218, %v227
        %v236 = vadd.f32 %v219, %v229
        %v237 = vadd.f32 %v220, %v231
        %238 = vrot.lane.b32.xlu0 %v212, 126
        %v239 = vpop.permute.xlu0 %238
        %240 = vrot.lane.b32.xlu0 %v214, 126
        %v241 = vpop.permute.xlu0 %240
        %242 = vrot.lane.b32.xlu0 %v213, 126
        %v243 = vpop.permute.xlu0 %242
        %v247 = vadd.f32 %v235, %v239
        %v248 = vadd.f32 %v236, %v241
        %v249 = vadd.f32 %v237, %v243
        %v250 = vmax.f32 %v247, -3.0
        %v251 = vmax.f32 %v248, -3.0
        %v252 = vmax.f32 %v249, -3.0
        %v253 = vmin.f32 %v250, 3.0
        %v254 = vmin.f32 %v251, 3.0
        %v255 = vmin.f32 %v252, 3.0
        %259 = vrot.lane.b32.xlu0 %v253, 127
        %v260 = vpop.permute.xlu0 %259
        %261 = vrot.lane.b32.xlu0 %v254, 127
        %v262 = vpop.permute.xlu0 %261
        %263 = vrot.lane.b32.xlu0 %v255, 127
        %v264 = vpop.permute.xlu0 %263
        %vm268 = vcmask 130049
        %269 = vst.msk [vmem:[%s58 - $0x1] sm:$0xfe] %vm268, %v260
        %vm270 = vcmask 130048
        %271 = vst.msk [vmem:[%s58 + $0x7] sm:$0xff] %vm270, %v262
        %vm272 = vcmask 122880
        %273 = vst.msk [vmem:[%s58 + $0xf] sm:$0x1] %vm272, %v264
        %v274 = vmul.f32 %v123, -0.083333336
        %v275 = vmul.f32 %v124, -0.083333336
        %v276 = vmul.f32 %v123, 0.16666667
        %v277 = vmul.f32 %v124, 0.16666667
        %280 = vrot.lane.b32.xlu0 %v276, 127
        %v281 = vpop.permute.xlu0 %280
        %282 = vrot.lane.b32.xlu0 %v277, 127
        %v283 = vpop.permute.xlu0 %282
        %v286 = vadd.f32 %v274, %v281
        %v287 = vadd.f32 %v275, %v283
        %v288 = vmul.f32 %v123, -0.16666667
        %v289 = vmul.f32 %v124, -0.16666667
        %292 = vrot.lane.b32.xlu0 %v288, 126
        %v293 = vpop.permute.xlu0 %292
        %294 = vrot.lane.b32.xlu0 %v289, 126
        %v295 = vpop.permute.xlu0 %294
        %v298 = vadd.f32 %v286, %v293
        %v299 = vadd.f32 %v287, %v295
        %300 = vrot.lane.b32.xlu0 %v276, 125
        %v301 = vpop.permute.xlu0 %300
        %302 = vrot.lane.b32.xlu0 %v277, 125
        %v303 = vpop.permute.xlu0 %302
        %v306 = vadd.f32 %v298, %v301
        %v307 = vadd.f32 %v299, %v303
        %310 = vrot.lane.b32.xlu0 %v274, 124
        %v311 = vpop.permute.xlu0 %310
        %312 = vrot.lane.b32.xlu0 %v275, 124
        %v313 = vpop.permute.xlu0 %312
        %v316 = vadd.f32 %v306, %v311
        %v317 = vadd.f32 %v307, %v313
        %v318 = vmul.f32 %v125, 0.16666667
        %v320 = vrot.slane %v276, 1
        %v321 = vrot.slane %v277, 1
        %v322 = vsel %vm162, %v320, %v321
        %v323 = vrot.slane %v318, 1
        %v324 = vsel %vm162, %v321, %v323
        %v327 = vadd.f32 %v316, %v322
        %v328 = vadd.f32 %v317, %v324
        %v329 = vmul.f32 %v123, -0.5
        %v330 = vmul.f32 %v124, -0.5
        %v331 = vmul.f32 %v125, -0.5
        %v335 = vrot.slane %v329, 1
        %v336 = vrot.slane %v330, 1
        %v337 = vsel %vm162, %v335, %v336
        %v338 = vrot.slane %v331, 1
        %v339 = vsel %vm162, %v336, %v338
        %340 = vrot.lane.b32.xlu0 %v337, 127
        %v341 = vpop.permute.xlu0 %340
        %342 = vrot.lane.b32.xlu0 %v339, 127
        %v343 = vpop.permute.xlu0 %342
        %v346 = vadd.f32 %v327, %v341
        %v347 = vadd.f32 %v328, %v343
        %v348 = vmul.f32 %v123, 0.6666667
        %v349 = vmul.f32 %v124, 0.6666667
        %v350 = vmul.f32 %v125, 0.6666667
        %v354 = vrot.slane %v348, 1
        %v355 = vrot.slane %v349, 1
        %v356 = vsel %vm162, %v354, %v355
        %v357 = vrot.slane %v350, 1
        %v358 = vsel %vm162, %v355, %v357
        %359 = vrot.lane.b32.xlu0 %v356, 126
        %v360 = vpop.permute.xlu0 %359
        %361 = vrot.lane.b32.xlu0 %v358, 126
        %v362 = vpop.permute.xlu0 %361
        %v365 = vadd.f32 %v346, %v360
        %v366 = vadd.f32 %v347, %v362
        %367 = vrot.lane.b32.xlu0 %v337, 125
        %v368 = vpop.permute.xlu0 %367
        %369 = vrot.lane.b32.xlu0 %v339, 125
        %v370 = vpop.permute.xlu0 %369
        %v373 = vadd.f32 %v365, %v368
        %v374 = vadd.f32 %v366, %v370
        %375 = vrot.lane.b32.xlu0 %v322, 124
        %v376 = vpop.permute.xlu0 %375
        %377 = vrot.lane.b32.xlu0 %v324, 124
        %v378 = vpop.permute.xlu0 %377
        %v381 = vadd.f32 %v373, %v376
        %v382 = vadd.f32 %v374, %v378
        %v383 = vmul.f32 %v125, -0.16666667
        %v385 = vrot.slane %v288, 2
        %v386 = vrot.slane %v289, 2
        %v387 = vsel %vm209, %v385, %v386
        %v388 = vrot.slane %v383, 2
        %v389 = vsel %vm209, %v386, %v388
        %v392 = vadd.f32 %v381, %v387
        %v393 = vadd.f32 %v382, %v389
        %v394 = vrot.slane %v348, 2
        %v395 = vrot.slane %v349, 2
        %v396 = vsel %vm209, %v394, %v395
        %v397 = vrot.slane %v350, 2
        %v398 = vsel %vm209, %v395, %v397
        %399 = vrot.lane.b32.xlu0 %v396, 127
        %v400 = vpop.permute.xlu0 %399
        %401 = vrot.lane.b32.xlu0 %v398, 127
        %v402 = vpop.permute.xlu0 %401
        %v405 = vadd.f32 %v392, %v400
        %v406 = vadd.f32 %v393, %v402
        %v407 = vrot.slane %v174, 2
        %v408 = vrot.slane %v175, 2
        %v409 = vsel %vm209, %v407, %v408
        %v410 = vrot.slane %v176, 2
        %v411 = vsel %vm209, %v408, %v410
        %412 = vrot.lane.b32.xlu0 %v409, 126
        %v413 = vpop.permute.xlu0 %412
        %414 = vrot.lane.b32.xlu0 %v411, 126
        %v415 = vpop.permute.xlu0 %414
        %v418 = vadd.f32 %v405, %v413
        %v419 = vadd.f32 %v406, %v415
        %420 = vrot.lane.b32.xlu0 %v396, 125
        %v421 = vpop.permute.xlu0 %420
        %422 = vrot.lane.b32.xlu0 %v398, 125
        %v423 = vpop.permute.xlu0 %422
        %v426 = vadd.f32 %v418, %v421
        %v427 = vadd.f32 %v419, %v423
        %428 = vrot.lane.b32.xlu0 %v387, 124
        %v429 = vpop.permute.xlu0 %428
        %430 = vrot.lane.b32.xlu0 %v389, 124
        %v431 = vpop.permute.xlu0 %430
        %v434 = vadd.f32 %v426, %v429
        %v435 = vadd.f32 %v427, %v431
        %vm436 = vcmask 1044480
        %v437 = vrot.slane %v276, 3
        %v438 = vrot.slane %v277, 3
        %v439 = vsel %vm436, %v437, %v438
        %v440 = vrot.slane %v318, 3
        %v441 = vsel %vm436, %v438, %v440
        %v444 = vadd.f32 %v434, %v439
        %v445 = vadd.f32 %v435, %v441
        %v446 = vrot.slane %v329, 3
        %v447 = vrot.slane %v330, 3
        %v448 = vsel %vm436, %v446, %v447
        %v449 = vrot.slane %v331, 3
        %v450 = vsel %vm436, %v447, %v449
        %451 = vrot.lane.b32.xlu0 %v448, 127
        %v452 = vpop.permute.xlu0 %451
        %453 = vrot.lane.b32.xlu0 %v450, 127
        %v454 = vpop.permute.xlu0 %453
        %v457 = vadd.f32 %v444, %v452
        %v458 = vadd.f32 %v445, %v454
        %v459 = vrot.slane %v348, 3
        %v460 = vrot.slane %v349, 3
        %v461 = vsel %vm436, %v459, %v460
        %v462 = vrot.slane %v350, 3
        %v463 = vsel %vm436, %v460, %v462
        %464 = vrot.lane.b32.xlu0 %v461, 126
        %v465 = vpop.permute.xlu0 %464
        %466 = vrot.lane.b32.xlu0 %v463, 126
        %v467 = vpop.permute.xlu0 %466
        %v470 = vadd.f32 %v457, %v465
        %v471 = vadd.f32 %v458, %v467
        %472 = vrot.lane.b32.xlu0 %v448, 125
        %v473 = vpop.permute.xlu0 %472
        %474 = vrot.lane.b32.xlu0 %v450, 125
        %v475 = vpop.permute.xlu0 %474
        %v478 = vadd.f32 %v470, %v473
        %v479 = vadd.f32 %v471, %v475
        %480 = vrot.lane.b32.xlu0 %v439, 124
        %v481 = vpop.permute.xlu0 %480
        %482 = vrot.lane.b32.xlu0 %v441, 124
        %v483 = vpop.permute.xlu0 %482
        %v486 = vadd.f32 %v478, %v481
        %v487 = vadd.f32 %v479, %v483
        %v488 = vmul.f32 %v125, -0.083333336
        %vm490 = vcmask 1043456
        %v491 = vrot.slane %v274, 4
        %v492 = vrot.slane %v275, 4
        %v493 = vsel %vm490, %v491, %v492
        %v494 = vrot.slane %v488, 4
        %v495 = vsel %vm490, %v492, %v494
        %v498 = vadd.f32 %v486, %v493
        %v499 = vadd.f32 %v487, %v495
        %v500 = vrot.slane %v276, 4
        %v501 = vrot.slane %v277, 4
        %v502 = vsel %vm490, %v500, %v501
        %v503 = vrot.slane %v318, 4
        %v504 = vsel %vm490, %v501, %v503
        %505 = vrot.lane.b32.xlu0 %v502, 127
        %v506 = vpop.permute.xlu0 %505
        %507 = vrot.lane.b32.xlu0 %v504, 127
        %v508 = vpop.permute.xlu0 %507
        %v511 = vadd.f32 %v498, %v506
        %v512 = vadd.f32 %v499, %v508
        %v513 = vrot.slane %v288, 4
        %v514 = vrot.slane %v289, 4
        %v515 = vsel %vm490, %v513, %v514
        %v516 = vrot.slane %v383, 4
        %v517 = vsel %vm490, %v514, %v516
        %518 = vrot.lane.b32.xlu0 %v515, 126
        %v519 = vpop.permute.xlu0 %518
        %520 = vrot.lane.b32.xlu0 %v517, 126
        %v521 = vpop.permute.xlu0 %520
        %v524 = vadd.f32 %v511, %v519
        %v525 = vadd.f32 %v512, %v521
        %526 = vrot.lane.b32.xlu0 %v502, 125
        %v527 = vpop.permute.xlu0 %526
        %528 = vrot.lane.b32.xlu0 %v504, 125
        %v529 = vpop.permute.xlu0 %528
        %v532 = vadd.f32 %v524, %v527
        %v533 = vadd.f32 %v525, %v529
        %534 = vrot.lane.b32.xlu0 %v493, 124
        %v535 = vpop.permute.xlu0 %534
        %536 = vrot.lane.b32.xlu0 %v495, 124
        %v537 = vpop.permute.xlu0 %536
        %v540 = vadd.f32 %v532, %v535
        %v541 = vadd.f32 %v533, %v537
        %v542 = vmax.f32 %v540, -3.0
        %v543 = vmax.f32 %v541, -3.0
        %v544 = vmin.f32 %v542, 3.0
        %v545 = vmin.f32 %v543, 3.0
        %s546 = scalar_lea.vmem %s58, 16 [#allocation4]
        %547 = vst.msk [vmem:[%s546] sm:$0xff] %vm270, %v544
        %548 = vst.msk [vmem:[%s546 + $0x8] sm:$0xff] %vm270, %v545
        %549 = vrot.lane.b32.xlu0 %v174, 127
        %v550 = vpop.permute.xlu0 %549
        %551 = vrot.lane.b32.xlu0 %v175, 127
        %v552 = vpop.permute.xlu0 %551
        %553 = vrot.lane.b32.xlu0 %v176, 127
        %v554 = vpop.permute.xlu0 %553
        %v558 = vadd.f32 %v129, %v550
        %v559 = vadd.f32 %v130, %v552
        %v560 = vadd.f32 %v131, %v554
        %561 = vrot.lane.b32.xlu0 %v129, 126
        %v562 = vpop.permute.xlu0 %561
        %563 = vrot.lane.b32.xlu0 %v130, 126
        %v564 = vpop.permute.xlu0 %563
        %565 = vrot.lane.b32.xlu0 %v131, 126
        %v566 = vpop.permute.xlu0 %565
        %v570 = vadd.f32 %v558, %v562
        %v571 = vadd.f32 %v559, %v564
        %v572 = vadd.f32 %v560, %v566
        %v573 = vmax.f32 %v570, -3.0
        %v574 = vmax.f32 %v571, -3.0
        %v575 = vmax.f32 %v572, -3.0
        %v576 = vmin.f32 %v573, 3.0
        %v577 = vmin.f32 %v574, 3.0
        %v578 = vmin.f32 %v575, 3.0
        %582 = vrot.lane.b32.xlu0 %v576, 127
        %v583 = vpop.permute.xlu0 %582
        %584 = vrot.lane.b32.xlu0 %v577, 127
        %v585 = vpop.permute.xlu0 %584
        %586 = vrot.lane.b32.xlu0 %v578, 127
        %v587 = vpop.permute.xlu0 %586
        %s591 = scalar_lea.vmem %s58, 32 [#allocation4]
        %vm592 = vcmask 130050
        %593 = vst.msk [vmem:[%s591 - $0x2] sm:$0xfc] %vm592, %v583
        %594 = vst.msk [vmem:[%s591 + $0x6] sm:$0xff] %vm270, %v585
        %vm595 = vcmask 123904
        %596 = vst.msk [vmem:[%s591 + $0xe] sm:$0x3] %vm595, %v587
        %s597 = sand.u32 %s31, 1
        %s598 = scalar_lea.sflag [#allocation5], %s597
        %s599 = sand.u32 %s31, 1
        %s600 = smul.addr %s599, 48
        %s601 = scalar_lea.vmem [#allocation4], %s600
        // Predicated region
        $region50: #{srm_conv2d_simple.1} parent=11 // pred_check
          %p602 = pneg %p37
        $region51: #{srm_conv2d_simple.1} parent=11 // pred_check_branch
          %604 = sbr.rel (%p602) target = $region53
        $region52: #{srm_conv2d_simple.1} parent=11 // pred_region
          %s605 = smul.u32 2, %s17
          %s607 = ssub.s32 768, 768
          %608 = vsyncadd %s598, %s607
          %s609 = smul.addr %s16, 6
          %s610 = sadd.s32 %s605, %s609
          %s611 = smul.addr %s610, 128
          %s612 = scalar_lea.hbm %s1, %s611
          %s613 = sshll.u32 %s601, 4
          %s614 = int_to_ptr.vmem [resolvable:$true] %s613
          %619 = dma.vmem_to_hbm [thread:$0]  %s614, 768, %s612, %s598, 128, 128, 8
        $region53: #{srm_conv2d_simple.1} parent=11 // pred_fallthru
          _
      $region12: #{srm_conv2d_simple.1} parent=5 // pred_fallthru
        _
      %p620 = scmp.le.s32.totalorder 1, %s10
      // Predicated region
      $region54: #{srm_conv2d_simple.1} parent=5 // pred_check
        %p621 = pneg %p620
      $region55: #{srm_conv2d_simple.1} parent=5 // pred_check_branch
        %623 = sbr.rel (%p621) target = $region57
      $region56: #{srm_conv2d_simple.1} parent=5 // pred_region
        %s624 = ssub.s32 %s10, 1
        // Predicated region
        $region58: #{srm_conv2d_simple.1} parent=56 // pred_check
          %p625 = pneg %p43
        $region59: #{srm_conv2d_simple.1} parent=56 // pred_check_branch
          %627 = sbr.rel (%p625) target = $region61
        $region60: #{srm_conv2d_simple.1} parent=56 // pred_region
          %s628 = sand.u32 %s34, 1
          %s629 = scalar_lea.sflag [#allocation5], %s628
          %s630 = sand.u32 %s34, 1
          %s631 = smul.addr %s630, 48
          %s632 = scalar_lea.vmem [#allocation4], %s631
          %633 = dma.done %s629, 768
        $region61: #{srm_conv2d_simple.1} parent=56 // pred_fallthru
          _
      $region57: #{srm_conv2d_simple.1} parent=5 // pred_fallthru
        _
    $region6: #{srm_conv2d_simple.1} parent=1 // loop_footer
      %s14 = sadd.s32 1, %s10
    $region7: #{srm_conv2d_simple.1} parent=1 // loop_footer_branch
      %9 = sbr.rel target = $region3
    $region8: #{srm_conv2d_simple.1} parent=1 // loop_exit
      _
    %634 = vsyncpa [#allocation5], 1
    %s635 = scalar_lea.sflag [#allocation5], 1
    %636 = vsyncpa %s635, 1
  %637 = vsyncmov [#allocation3]
  %s638 = vpop.sfrf %637
  %p639 = scmp.eq.s32.totalorder %s638, 0
  %p640 = pneg %p639
  %642 = shalt.err (%p640)
  %s643 = scalar_lea.sflag [#allocation3], 1
  %644 = vsyncmov %s643
  %s645 = vpop.sfrf %644
  %p646 = scmp.eq.s32.totalorder %s645, 0
  %p647 = pneg %p646
  %649 = shalt.err (%p647)

</llo_original>
